<compile_context>
chip_gen: v7x
topology: tpu7x:2x2x1
jax: 0.10.0
libtpu: 0.0.40
codegen_flags: <defaults>
</compile_context>

<pallas_src>
from math import floor

import jax
import jax.numpy as jnp
from jax.experimental import pallas as pl
from jax.experimental.pallas import tpu as pltpu


# ----------------------------- fused Pallas kernel -------------------------- #

def _xhi_block(a, x, w_ref, b_ref, k):
    """One XhiLayer: reservoir [X, AX, ..., A^{k-1}X] -> masked linear -> tanh.

    Implemented as k accumulated row-block dots against the (pre-masked)
    weight instead of a lane-axis concatenate followed by one big matmul.
    """
    cin = x.shape[1]
    t = x
    h = jnp.dot(t, w_ref[0:cin, :], preferred_element_type=jnp.float32)
    for i in range(1, k):                       # k is tiny -> static unroll
        t = jnp.dot(a, t, preferred_element_type=jnp.float32)
        h = h + jnp.dot(t, w_ref[i * cin:(i + 1) * cin, :],
                        preferred_element_type=jnp.float32)
    return jnp.tanh(h + b_ref[...])


def make_mrgnn_kernel(k, n_conv):
    """Build the fused forward kernel for a given (static) k and conv count."""

    def kernel(a_ref, x_ref, gc1_w_ref, gc1_b_ref, *refs):
        conv_refs = refs[:2 * n_conv]
        (w1_ref, b1_ref, w2_ref, b2_ref, w3_ref, b3_ref,
         o_ref) = refs[2 * n_conv:]

        a = a_ref[...]                           # adjacency reused by every layer
        h = _xhi_block(a, x_ref[...], gc1_w_ref, gc1_b_ref, k)
        for li in range(n_conv):
            h = _xhi_block(a, h, conv_refs[2 * li], conv_refs[2 * li + 1], k)

        # funnel head (eval): bn_out already folded into lin1 host-side,
        # dropout = identity -> relu(lin1) -> relu(lin2) -> lin3.
        h1 = jnp.maximum(
            jnp.dot(h, w1_ref[...], preferred_element_type=jnp.float32)
            + b1_ref[...], 0.0)
        h2 = jnp.maximum(
            jnp.dot(h1, w2_ref[...], preferred_element_type=jnp.float32)
            + b2_ref[...], 0.0)
        o_ref[...] = (jnp.dot(h2, w3_ref[...],
                              preferred_element_type=jnp.float32)
                      + b3_ref[...])

    return kernel


def mrgnn_forward(params, a_hat, x, k):
    """Single fused pallas_call for the whole MRGNN forward pass."""
    n_conv = len(params["convs"])
    args = [a_hat, x, params["gc1_w"], params["gc1_b"]]
    for (w, b) in params["convs"]:
        args.extend((w, b))
    args.extend((params["lin1_w"], params["lin1_b"],
                 params["lin2_w"], params["lin2_b"],
                 params["lin3_w"], params["lin3_b"]))

    n = x.shape[0]
    n_classes = params["lin3_w"].shape[1]
    vspec = pl.BlockSpec(memory_space=pltpu.MemorySpace.VMEM)
    return pl.pallas_call(
        make_mrgnn_kernel(k, n_conv),
        out_shape=jax.ShapeDtypeStruct((n, n_classes), jnp.float32),
        in_specs=[vspec] * len(args),
        out_specs=vspec,
    )(*args)


# ------------------------------ model construction -------------------------- #

def get_xhi_layer_mask(in_channels, out_channels, k):
    """Faithful port of MRGNN.get_xhi_layer_mask -> [out_channels*k, in_channels*k]."""
    rows = []
    for i in range(k):
        ones = jnp.ones((out_channels, in_channels * (i + 1)), jnp.float32)
        zeros = jnp.zeros((out_channels, in_channels * (k - (i + 1))), jnp.float32)
        rows.append(jnp.concatenate([ones, zeros], axis=1))
    return jnp.concatenate(rows, axis=0)


def init_linear(key, fan_in, fan_out):
    """Deterministic stand-in for torch Linear init (uniform in +-1/sqrt(fan_in))."""
    kw, kb = jax.random.split(key)
    bound = 1.0 / jnp.sqrt(fan_in)
    w = jax.random.uniform(kw, (fan_in, fan_out), jnp.float32, -bound, bound)
    b = jax.random.uniform(kb, (1, fan_out), jnp.float32, -bound, bound)
    return w, b


def build_mrgnn_params(key, n_features, n_hidden, n_classes, n_layers, k):
    params = {}
    n_conv = n_layers - 2
    keys = jax.random.split(key, 4 + n_conv)

    # gc1 : XhiLayer(in=n_features, out=n_hidden, k)  -- mask baked into W.
    w, b = init_linear(keys[0], n_features * k, n_hidden * k)
    mask = get_xhi_layer_mask(n_features, n_hidden, k).T        # [in*k, out*k]
    params["gc1_w"] = w * mask
    params["gc1_b"] = b

    # convs : (n_layers-2) x XhiLayer(in=n_hidden*k, out=n_hidden, k)
    params["convs"] = []
    for i in range(n_conv):
        w, b = init_linear(keys[1 + i], n_hidden * k * k, n_hidden * k)
        mask = get_xhi_layer_mask(n_hidden * k, n_hidden, k).T
        params["convs"].append((w * mask, b))

    # bn_out (eval, running mean=0 var=1, gamma=1 beta=0) -> per-channel affine
    # x*scale + shift, folded into lin1:
    #   relu((x*scale + shift) @ W1 + b1) = relu(x @ (scale^T * W1) + (shift @ W1 + b1))
    eps = 1e-5
    d = n_hidden * k
    gamma = jnp.ones((1, d), jnp.float32)
    beta = jnp.zeros((1, d), jnp.float32)
    run_mean = jnp.zeros((1, d), jnp.float32)
    run_var = jnp.ones((1, d), jnp.float32)
    scale = gamma / jnp.sqrt(run_var + eps)
    shift = beta - run_mean * scale

    # funnel head (bn folded into lin1)
    half = floor(n_hidden / 2) * k
    w1, b1 = init_linear(keys[1 + n_conv], d, d)
    params["lin1_w"] = scale.reshape(-1, 1) * w1           # per-input-channel scale
    params["lin1_b"] = shift @ w1 + b1
    params["lin2_w"], params["lin2_b"] = init_linear(keys[2 + n_conv], d, half)
    params["lin3_w"], params["lin3_b"] = init_linear(keys[3 + n_conv], half, n_classes)
    return params


def normalized_adjacency(key, n_nodes):
    """Deterministic random undirected graph; A_hat = D^-1/2 (A + I) D^-1/2."""
    raw = jax.random.bernoulli(key, 0.3, (n_nodes, n_nodes)).astype(jnp.float32)
    adj = jnp.maximum(raw, raw.T)
    adj = jnp.maximum(adj, jnp.eye(n_nodes, dtype=jnp.float32))   # add self loops
    deg = jnp.sum(adj, axis=1)
    d_inv_sqrt = 1.0 / jnp.sqrt(deg)
    return adj * d_inv_sqrt[:, None] * d_inv_sqrt[None, :]


# ------------------------------------ main ---------------------------------- #

if __name__ == "__main__":
    n_nodes = 16
    n_features = 8
    n_hidden = 16
    n_classes = 4
    n_layers = 3
    k = 3

    key = jax.random.PRNGKey(0)
    k_x, k_g, k_p = jax.random.split(key, 3)

    x = jax.random.normal(k_x, (n_nodes, n_features), jnp.float32)
    a_hat = normalized_adjacency(k_g, n_nodes)
    params = build_mrgnn_params(k_p, n_features, n_hidden, n_classes, n_layers, k)

    out = mrgnn_forward(params, a_hat, x, k)
    jax.block_until_ready(out)
    assert out.shape == (n_nodes, n_classes)
    print("KERNEL_OK")
</pallas_src>

<mosaic_0001>
module attributes {stable_mosaic.version = 11 : i64} {
  func.func @kernel(%arg0: memref<16x16xf32, #tpu.memory_space<vmem>>, %arg1: memref<16x8xf32, #tpu.memory_space<vmem>>, %arg2: memref<24x48xf32, #tpu.memory_space<vmem>>, %arg3: memref<1x48xf32, #tpu.memory_space<vmem>>, %arg4: memref<144x48xf32, #tpu.memory_space<vmem>>, %arg5: memref<1x48xf32, #tpu.memory_space<vmem>>, %arg6: memref<48x48xf32, #tpu.memory_space<vmem>>, %arg7: memref<1x48xf32, #tpu.memory_space<vmem>>, %arg8: memref<48x24xf32, #tpu.memory_space<vmem>>, %arg9: memref<1x24xf32, #tpu.memory_space<vmem>>, %arg10: memref<24x4xf32, #tpu.memory_space<vmem>>, %arg11: memref<1x4xf32, #tpu.memory_space<vmem>>, %arg12: memref<16x4xf32, #tpu.memory_space<vmem>>) attributes {dimension_semantics = [], scalar_prefetch = 0 : i64, scratch_operands = 0 : i64, tpu.core_type = #tpu.core_type<tc>} {
    %c0 = arith.constant 0 : index
    %c0_0 = arith.constant 0 : index
    %0 = vector.load %arg0[%c0, %c0_0] : memref<16x16xf32, #tpu.memory_space<vmem>>, vector<16x16xf32>
    %c0_1 = arith.constant 0 : index
    %c0_2 = arith.constant 0 : index
    %1 = vector.load %arg1[%c0_1, %c0_2] : memref<16x8xf32, #tpu.memory_space<vmem>>, vector<16x8xf32>
    %c0_3 = arith.constant 0 : index
    %c0_4 = arith.constant 0 : index
    %2 = vector.load %arg2[%c0_3, %c0_4] : memref<24x48xf32, #tpu.memory_space<vmem>>, vector<8x48xf32>
    %cst = arith.constant dense<0.000000e+00> : vector<16x48xf32>
    %3 = tpu.matmul %1, %2, %cst {dimension_numbers = #tpu.dot_dimension_numbers<[1], [0], [0], [1], [0, 0, 1, 1], [], []>} : vector<16x8xf32>, vector<8x48xf32>, vector<16x48xf32> -> vector<16x48xf32>
    %cst_5 = arith.constant dense<0.000000e+00> : vector<16x8xf32>
    %4 = tpu.matmul %0, %1, %cst_5 {dimension_numbers = #tpu.dot_dimension_numbers<[1], [0], [0], [1], [0, 0, 1, 1], [], []>} : vector<16x16xf32>, vector<16x8xf32>, vector<16x8xf32> -> vector<16x8xf32>
    %c8 = arith.constant 8 : index
    %c0_6 = arith.constant 0 : index
    %5 = vector.load %arg2[%c8, %c0_6] : memref<24x48xf32, #tpu.memory_space<vmem>>, vector<8x48xf32>
    %cst_7 = arith.constant dense<0.000000e+00> : vector<16x48xf32>
    %6 = tpu.matmul %4, %5, %cst_7 {dimension_numbers = #tpu.dot_dimension_numbers<[1], [0], [0], [1], [0, 0, 1, 1], [], []>} : vector<16x8xf32>, vector<8x48xf32>, vector<16x48xf32> -> vector<16x48xf32>
    %7 = arith.addf %3, %6 : vector<16x48xf32>
    %cst_8 = arith.constant dense<0.000000e+00> : vector<16x8xf32>
    %8 = tpu.matmul %0, %4, %cst_8 {dimension_numbers = #tpu.dot_dimension_numbers<[1], [0], [0], [1], [0, 0, 1, 1], [], []>} : vector<16x16xf32>, vector<16x8xf32>, vector<16x8xf32> -> vector<16x8xf32>
    %c16 = arith.constant 16 : index
    %c0_9 = arith.constant 0 : index
    %9 = vector.load %arg2[%c16, %c0_9] : memref<24x48xf32, #tpu.memory_space<vmem>>, vector<8x48xf32>
    %cst_10 = arith.constant dense<0.000000e+00> : vector<16x48xf32>
    %10 = tpu.matmul %8, %9, %cst_10 {dimension_numbers = #tpu.dot_dimension_numbers<[1], [0], [0], [1], [0, 0, 1, 1], [], []>} : vector<16x8xf32>, vector<8x48xf32>, vector<16x48xf32> -> vector<16x48xf32>
    %11 = arith.addf %7, %10 : vector<16x48xf32>
    %c0_11 = arith.constant 0 : index
    %c0_12 = arith.constant 0 : index
    %12 = vector.load %arg3[%c0_11, %c0_12] : memref<1x48xf32, #tpu.memory_space<vmem>>, vector<1x48xf32>
    %13 = vector.broadcast %12 : vector<1x48xf32> to vector<16x48xf32>
    %14 = arith.addf %11, %13 : vector<16x48xf32>
    %15 = math.tanh %14 : vector<16x48xf32>
    %c0_13 = arith.constant 0 : index
    %c0_14 = arith.constant 0 : index
    %16 = vector.load %arg4[%c0_13, %c0_14] : memref<144x48xf32, #tpu.memory_space<vmem>>, vector<48x48xf32>
    %cst_15 = arith.constant dense<0.000000e+00> : vector<16x48xf32>
    %17 = tpu.matmul %15, %16, %cst_15 {dimension_numbers = #tpu.dot_dimension_numbers<[1], [0], [0], [1], [0, 0, 1, 1], [], []>} : vector<16x48xf32>, vector<48x48xf32>, vector<16x48xf32> -> vector<16x48xf32>
    %cst_16 = arith.constant dense<0.000000e+00> : vector<16x48xf32>
    %18 = tpu.matmul %0, %15, %cst_16 {dimension_numbers = #tpu.dot_dimension_numbers<[1], [0], [0], [1], [0, 0, 1, 1], [], []>} : vector<16x16xf32>, vector<16x48xf32>, vector<16x48xf32> -> vector<16x48xf32>
    %c48 = arith.constant 48 : index
    %c0_17 = arith.constant 0 : index
    %19 = vector.load %arg4[%c48, %c0_17] : memref<144x48xf32, #tpu.memory_space<vmem>>, vector<48x48xf32>
    %cst_18 = arith.constant dense<0.000000e+00> : vector<16x48xf32>
    %20 = tpu.matmul %18, %19, %cst_18 {dimension_numbers = #tpu.dot_dimension_numbers<[1], [0], [0], [1], [0, 0, 1, 1], [], []>} : vector<16x48xf32>, vector<48x48xf32>, vector<16x48xf32> -> vector<16x48xf32>
    %21 = arith.addf %17, %20 : vector<16x48xf32>
    %cst_19 = arith.constant dense<0.000000e+00> : vector<16x48xf32>
    %22 = tpu.matmul %0, %18, %cst_19 {dimension_numbers = #tpu.dot_dimension_numbers<[1], [0], [0], [1], [0, 0, 1, 1], [], []>} : vector<16x16xf32>, vector<16x48xf32>, vector<16x48xf32> -> vector<16x48xf32>
    %c96 = arith.constant 96 : index
    %c0_20 = arith.constant 0 : index
    %23 = vector.load %arg4[%c96, %c0_20] : memref<144x48xf32, #tpu.memory_space<vmem>>, vector<48x48xf32>
    %cst_21 = arith.constant dense<0.000000e+00> : vector<16x48xf32>
    %24 = tpu.matmul %22, %23, %cst_21 {dimension_numbers = #tpu.dot_dimension_numbers<[1], [0], [0], [1], [0, 0, 1, 1], [], []>} : vector<16x48xf32>, vector<48x48xf32>, vector<16x48xf32> -> vector<16x48xf32>
    %25 = arith.addf %21, %24 : vector<16x48xf32>
    %c0_22 = arith.constant 0 : index
    %c0_23 = arith.constant 0 : index
    %26 = vector.load %arg5[%c0_22, %c0_23] : memref<1x48xf32, #tpu.memory_space<vmem>>, vector<1x48xf32>
    %27 = vector.broadcast %26 : vector<1x48xf32> to vector<16x48xf32>
    %28 = arith.addf %25, %27 : vector<16x48xf32>
    %29 = math.tanh %28 : vector<16x48xf32>
    %c0_24 = arith.constant 0 : index
    %c0_25 = arith.constant 0 : index
    %30 = vector.load %arg6[%c0_24, %c0_25] : memref<48x48xf32, #tpu.memory_space<vmem>>, vector<48x48xf32>
    %cst_26 = arith.constant dense<0.000000e+00> : vector<16x48xf32>
    %31 = tpu.matmul %29, %30, %cst_26 {dimension_numbers = #tpu.dot_dimension_numbers<[1], [0], [0], [1], [0, 0, 1, 1], [], []>} : vector<16x48xf32>, vector<48x48xf32>, vector<16x48xf32> -> vector<16x48xf32>
    %c0_27 = arith.constant 0 : index
    %c0_28 = arith.constant 0 : index
    %32 = vector.load %arg7[%c0_27, %c0_28] : memref<1x48xf32, #tpu.memory_space<vmem>>, vector<1x48xf32>
    %33 = vector.broadcast %32 : vector<1x48xf32> to vector<16x48xf32>
    %34 = arith.addf %31, %33 : vector<16x48xf32>
    %cst_29 = arith.constant 0.000000e+00 : f32
    %35 = vector.broadcast %cst_29 : f32 to vector<16x48xf32>
    %36 = arith.maximumf %34, %35 : vector<16x48xf32>
    %c0_30 = arith.constant 0 : index
    %c0_31 = arith.constant 0 : index
    %37 = vector.load %arg8[%c0_30, %c0_31] : memref<48x24xf32, #tpu.memory_space<vmem>>, vector<48x24xf32>
    %cst_32 = arith.constant dense<0.000000e+00> : vector<16x24xf32>
    %38 = tpu.matmul %36, %37, %cst_32 {dimension_numbers = #tpu.dot_dimension_numbers<[1], [0], [0], [1], [0, 0, 1, 1], [], []>} : vector<16x48xf32>, vector<48x24xf32>, vector<16x24xf32> -> vector<16x24xf32>
    %c0_33 = arith.constant 0 : index
    %c0_34 = arith.constant 0 : index
    %39 = vector.load %arg9[%c0_33, %c0_34] : memref<1x24xf32, #tpu.memory_space<vmem>>, vector<1x24xf32>
    %40 = vector.broadcast %39 : vector<1x24xf32> to vector<16x24xf32>
    %41 = arith.addf %38, %40 : vector<16x24xf32>
    %cst_35 = arith.constant 0.000000e+00 : f32
    %42 = vector.broadcast %cst_35 : f32 to vector<16x24xf32>
    %43 = arith.maximumf %41, %42 : vector<16x24xf32>
    %c0_36 = arith.constant 0 : index
    %c0_37 = arith.constant 0 : index
    %44 = vector.load %arg10[%c0_36, %c0_37] : memref<24x4xf32, #tpu.memory_space<vmem>>, vector<24x4xf32>
    %cst_38 = arith.constant dense<0.000000e+00> : vector<16x4xf32>
    %45 = tpu.matmul %43, %44, %cst_38 {dimension_numbers = #tpu.dot_dimension_numbers<[1], [0], [0], [1], [0, 0, 1, 1], [], []>} : vector<16x24xf32>, vector<24x4xf32>, vector<16x4xf32> -> vector<16x4xf32>
    %c0_39 = arith.constant 0 : index
    %c0_40 = arith.constant 0 : index
    %46 = vector.load %arg11[%c0_39, %c0_40] : memref<1x4xf32, #tpu.memory_space<vmem>>, vector<1x4xf32>
    %47 = vector.broadcast %46 : vector<1x4xf32> to vector<16x4xf32>
    %48 = arith.addf %45, %47 : vector<16x4xf32>
    %c0_41 = arith.constant 0 : index
    %c0_42 = arith.constant 0 : index
    %49 = vector.load %arg12[%c0_41, %c0_42] : memref<16x4xf32, #tpu.memory_space<vmem>>, vector<16x4xf32>
    tpu.vector_store %arg12[%c0_41, %c0_42], %48 {strides = array<i32>} : memref<16x4xf32, #tpu.memory_space<vmem>>, vector<16x4xf32>,
    return
  }
}

</mosaic_0001>

<llo_original>
// kernel: tpu_custom_call.1
$region0: #{tpu_custom_call.1}
  #allocation0 [shape = 'u32[]', space=smem, size = 0x4, offset = 0x4, fixed_abs, tag = 'smem constant byte address 0x4 - core index']
  #allocation1 [shape = 'u32[144,128]{1,0:T(1,128)}', space=vmem, size = 0x12000, scoped, tag = 'internal scratch']
  %s0 = inlined_call_operand.vmem [shape: f32[16,16], index: 0, kind: input, shape index: {}]
  %s1 = inlined_call_operand.vmem [shape: f32[16,8], index: 1, kind: input, shape index: {}]
  %s2 = inlined_call_operand.vmem [shape: f32[24,48], index: 2, kind: input, shape index: {}]
  %s3 = inlined_call_operand.vmem [shape: f32[1,48], index: 3, kind: input, shape index: {}]
  %s4 = inlined_call_operand.vmem [shape: f32[144,48], index: 4, kind: input, shape index: {}]
  %s5 = inlined_call_operand.vmem [shape: f32[1,48], index: 5, kind: input, shape index: {}]
  %s6 = inlined_call_operand.vmem [shape: f32[48,48], index: 6, kind: input, shape index: {}]
  %s7 = inlined_call_operand.vmem [shape: f32[1,48], index: 7, kind: input, shape index: {}]
  %s8 = inlined_call_operand.vmem [shape: f32[48,24], index: 8, kind: input, shape index: {}]
  %s9 = inlined_call_operand.vmem [shape: f32[1,24], index: 9, kind: input, shape index: {}]
  %s10 = inlined_call_operand.vmem [shape: f32[24,4], index: 10, kind: input, shape index: {}]
  %s11 = inlined_call_operand.vmem [shape: f32[1,4], index: 11, kind: input, shape index: {}]
  %s12 = inlined_call_operand.vmem [shape: f32[16,4], index: 12, kind: output, shape index: {}]
  %s13 = sld [smem:[#allocation0]]
  $region58: #{tpu_custom_call.1} parent=0
    _
  %s15 = ssub.s32 1, %s13
  %s16 = scalar_select 0, %s15, %s13
  // Predicated region
  $region2: #{tpu_custom_call.1} parent=0 // pred_check
    _
  $region3: #{tpu_custom_call.1} parent=0 // pred_check_branch
    %18 = sbr.rel (0) target = $region5
  $region4: #{tpu_custom_call.1} parent=0 // pred_region
    _
  $region5: #{tpu_custom_call.1} parent=0 // pred_fallthru
    _
  // Predicated region
  $region6: #{tpu_custom_call.1} parent=0 // pred_check
    _
  $region7: #{tpu_custom_call.1} parent=0 // pred_check_branch
    %20 = sbr.rel (0) target = $region9
  $region8: #{tpu_custom_call.1} parent=0 // pred_region
    _
  $region9: #{tpu_custom_call.1} parent=0 // pred_fallthru
    _
  // Predicated region
  $region10: #{tpu_custom_call.1} parent=0 // pred_check
    _
  $region11: #{tpu_custom_call.1} parent=0 // pred_check_branch
    %22 = sbr.rel (0) target = $region13
  $region12: #{tpu_custom_call.1} parent=0 // pred_region
    _
  $region13: #{tpu_custom_call.1} parent=0 // pred_fallthru
    _
  // Predicated region
  $region14: #{tpu_custom_call.1} parent=0 // pred_check
    _
  $region15: #{tpu_custom_call.1} parent=0 // pred_check_branch
    %24 = sbr.rel (0) target = $region17
  $region16: #{tpu_custom_call.1} parent=0 // pred_region
    _
  $region17: #{tpu_custom_call.1} parent=0 // pred_fallthru
    _
  // Predicated region
  $region18: #{tpu_custom_call.1} parent=0 // pred_check
    _
  $region19: #{tpu_custom_call.1} parent=0 // pred_check_branch
    %26 = sbr.rel (0) target = $region21
  $region20: #{tpu_custom_call.1} parent=0 // pred_region
    _
  $region21: #{tpu_custom_call.1} parent=0 // pred_fallthru
    _
  // Predicated region
  $region22: #{tpu_custom_call.1} parent=0 // pred_check
    _
  $region23: #{tpu_custom_call.1} parent=0 // pred_check_branch
    %28 = sbr.rel (0) target = $region25
  $region24: #{tpu_custom_call.1} parent=0 // pred_region
    _
  $region25: #{tpu_custom_call.1} parent=0 // pred_fallthru
    _
  // Predicated region
  $region26: #{tpu_custom_call.1} parent=0 // pred_check
    _
  $region27: #{tpu_custom_call.1} parent=0 // pred_check_branch
    %30 = sbr.rel (0) target = $region29
  $region28: #{tpu_custom_call.1} parent=0 // pred_region
    _
  $region29: #{tpu_custom_call.1} parent=0 // pred_fallthru
    _
  // Predicated region
  $region30: #{tpu_custom_call.1} parent=0 // pred_check
    _
  $region31: #{tpu_custom_call.1} parent=0 // pred_check_branch
    %32 = sbr.rel (0) target = $region33
  $region32: #{tpu_custom_call.1} parent=0 // pred_region
    _
  $region33: #{tpu_custom_call.1} parent=0 // pred_fallthru
    _
  // Predicated region
  $region34: #{tpu_custom_call.1} parent=0 // pred_check
    _
  $region35: #{tpu_custom_call.1} parent=0 // pred_check_branch
    %34 = sbr.rel (0) target = $region37
  $region36: #{tpu_custom_call.1} parent=0 // pred_region
    _
  $region37: #{tpu_custom_call.1} parent=0 // pred_fallthru
    _
  // Predicated region
  $region38: #{tpu_custom_call.1} parent=0 // pred_check
    _
  $region39: #{tpu_custom_call.1} parent=0 // pred_check_branch
    %36 = sbr.rel (0) target = $region41
  $region40: #{tpu_custom_call.1} parent=0 // pred_region
    _
  $region41: #{tpu_custom_call.1} parent=0 // pred_fallthru
    _
  // Predicated region
  $region42: #{tpu_custom_call.1} parent=0 // pred_check
    _
  $region43: #{tpu_custom_call.1} parent=0 // pred_check_branch
    %38 = sbr.rel (0) target = $region45
  $region44: #{tpu_custom_call.1} parent=0 // pred_region
    _
  $region45: #{tpu_custom_call.1} parent=0 // pred_fallthru
    _
  // Predicated region
  $region46: #{tpu_custom_call.1} parent=0 // pred_check
    _
  $region47: #{tpu_custom_call.1} parent=0 // pred_check_branch
    %40 = sbr.rel (0) target = $region49
  $region48: #{tpu_custom_call.1} parent=0 // pred_region
    _
  $region49: #{tpu_custom_call.1} parent=0 // pred_fallthru
    _
  %v41 = vld [vmem:[%s0] sm:$0xff]
  %v42 = vld [vmem:[%s0 + $0x8] sm:$0xff]
  %v43 = vld [vmem:[%s1] sm:$0xff]
  %v44 = vld [vmem:[%s1 + $0x8] sm:$0xff]
  %v45 = vld [vmem:[%s2] sm:$0xff]
  %vm46 = vcmask 130048
  %v48 = vsel %vm46, %v41, 0
  %v51 = vsel %vm46, %v42, 0
  %53 = vmatprep.subr.mxu0 0.0
  %54 = vmatpush1.msra.mxu0 %v43
  %55 = vmatprep.subr.mxu0 0.0
  %56 = vmatpush1.msra.mxu0 %v44
  %57 = vmatprep.subr.mxu0 0.0
  %58 = vmatpush1.msra.mxu0 0.0
  %59 = vmatprep.subr.mxu0 0.0
  %60 = vmatpush1.msra.mxu0 0.0
  %61 = vmatprep.subr.mxu0 0.0
  %62 = vmatpush1.msra.mxu0 0.0
  %63 = vmatprep.subr.mxu0 0.0
  %64 = vmatpush1.msra.mxu0 0.0
  %65 = vmatprep.subr.mxu0 0.0
  %66 = vmatpush1.msra.mxu0 0.0
  %67 = vmatprep.subr.mxu0 0.0
  %68 = vmatpush1.msra.mxu0 0.0
  %69 = vmatprep.subr.mxu0 0.0
  %70 = vmatpush1.msra.mxu0 0.0
  %71 = vmatprep.subr.mxu0 0.0
  %72 = vmatpush1.msra.mxu0 0.0
  %73 = vmatprep.subr.mxu0 0.0
  %74 = vmatpush1.msra.mxu0 0.0
  %75 = vmatprep.subr.mxu0 0.0
  %76 = vmatpush1.msra.mxu0 0.0
  %77 = vmatprep.subr.mxu0 0.0
  %78 = vmatpush1.msra.mxu0 0.0
  %79 = vmatprep.subr.mxu0 0.0
  %80 = vmatpush1.msra.mxu0 0.0
  %81 = vmatprep.subr.mxu0 0.0
  %82 = vmatpush1.msra.mxu0 0.0
  %83 = vmatprep.subr.mxu0 0.0
  %84 = vmatpush1.msra.mxu0 0.0
  %85 = vmatprep.subr.mxu0 0.0
  %86 = vmatpush1.msra.mxu0 0.0
  %87 = vmatprep.subr.mxu0 0.0
  %88 = vmatpush1.msra.mxu0 0.0
  %89 = vmatprep.subr.mxu0 0.0
  %90 = vmatpush1.msra.mxu0 0.0
  %91 = vmatprep.subr.mxu0 0.0
  %92 = vmatpush1.msra.mxu0 0.0
  %93 = vmatprep.subr.mxu0 0.0
  %94 = vmatpush1.msra.mxu0 0.0
  %95 = vmatprep.subr.mxu0 0.0
  %96 = vmatpush1.msra.mxu0 0.0
  %97 = vmatprep.subr.mxu0 0.0
  %98 = vmatpush1.msra.mxu0 0.0
  %99 = vmatprep.subr.mxu0 0.0
  %100 = vmatpush1.msra.mxu0 0.0
  %101 = vmatprep.subr.mxu0 0.0
  %102 = vmatpush1.msra.mxu0 0.0
  %103 = vmatprep.subr.mxu0 0.0
  %104 = vmatpush1.msra.mxu0 0.0
  %105 = vmatprep.subr.mxu0 0.0
  %106 = vmatpush1.msra.mxu0 0.0
  %107 = vmatprep.subr.mxu0 0.0
  %108 = vmatpush1.msra.mxu0 0.0
  %109 = vmatprep.subr.mxu0 0.0
  %110 = vmatpush1.msra.mxu0 0.0
  %111 = vmatprep.subr.mxu0 0.0
  %112 = vmatpush1.msra.mxu0 0.0
  %113 = vmatprep.subr.mxu0 0.0
  %114 = vmatpush1.msra.mxu0 0.0
  %115 = vmatprep.subr.mxu0 0.0
  %116 = vmatpush1.msra.mxu0 0.0
  %117 = vmatprep.mubr.f32.mxu0 0.0
  %118 = vmatmul.mubr.f32.gmra.mrb[0].mxu0 %v48
  %v119 = vpop.f32.mrb[0].mxu0
  %v120 = vadd.f32 0.0, %v119
  %v121 = vpop.f32.mrb[0].mxu0
  %122 = vmatprep.mubr.f32.mxu0 0.0
  %123 = vmatmul.mubr.f32.gmra.mrb[0].mxu0 %v51
  %v124 = vpop.f32.mrb[0].mxu0
  %v125 = vadd.f32 0.0, %v124
  %v126 = vpop.f32.mrb[0].mxu0
  %127 = vdwg.mxu0
  %v128 = vld [vmem:[%s2 + $0x8] sm:$0xff]
  %vm129 = vcmask 64512
  %v131 = vsel %vm129, %v120, 0
  %v134 = vsel %vm129, %v125, 0
  %136 = vmatprep.subr.mxu0 0.0
  %137 = vmatpush1.msra.mxu0 %v128
  %138 = vmatprep.subr.mxu0 0.0
  %139 = vmatpush1.msra.mxu0 0.0
  %140 = vmatprep.subr.mxu0 0.0
  %141 = vmatpush1.msra.mxu0 0.0
  %142 = vmatprep.subr.mxu0 0.0
  %143 = vmatpush1.msra.mxu0 0.0
  %144 = vmatprep.subr.mxu0 0.0
  %145 = vmatpush1.msra.mxu0 0.0
  %146 = vmatprep.subr.mxu0 0.0
  %147 = vmatpush1.msra.mxu0 0.0
  %148 = vmatprep.subr.mxu0 0.0
  %149 = vmatpush1.msra.mxu0 0.0
  %150 = vmatprep.subr.mxu0 0.0
  %151 = vmatpush1.msra.mxu0 0.0
  %152 = vmatprep.subr.mxu0 0.0
  %153 = vmatpush1.msra.mxu0 0.0
  %154 = vmatprep.subr.mxu0 0.0
  %155 = vmatpush1.msra.mxu0 0.0
  %156 = vmatprep.subr.mxu0 0.0
  %157 = vmatpush1.msra.mxu0 0.0
  %158 = vmatprep.subr.mxu0 0.0
  %159 = vmatpush1.msra.mxu0 0.0
  %160 = vmatprep.subr.mxu0 0.0
  %161 = vmatpush1.msra.mxu0 0.0
  %162 = vmatprep.subr.mxu0 0.0
  %163 = vmatpush1.msra.mxu0 0.0
  %164 = vmatprep.subr.mxu0 0.0
  %165 = vmatpush1.msra.mxu0 0.0
  %166 = vmatprep.subr.mxu0 0.0
  %167 = vmatpush1.msra.mxu0 0.0
  %168 = vmatprep.subr.mxu0 0.0
  %169 = vmatpush1.msra.mxu0 0.0
  %170 = vmatprep.subr.mxu0 0.0
  %171 = vmatpush1.msra.mxu0 0.0
  %172 = vmatprep.subr.mxu0 0.0
  %173 = vmatpush1.msra.mxu0 0.0
  %174 = vmatprep.subr.mxu0 0.0
  %175 = vmatpush1.msra.mxu0 0.0
  %176 = vmatprep.subr.mxu0 0.0
  %177 = vmatpush1.msra.mxu0 0.0
  %178 = vmatprep.subr.mxu0 0.0
  %179 = vmatpush1.msra.mxu0 0.0
  %180 = vmatprep.subr.mxu0 0.0
  %181 = vmatpush1.msra.mxu0 0.0
  %182 = vmatprep.subr.mxu0 0.0
  %183 = vmatpush1.msra.mxu0 0.0
  %184 = vmatprep.subr.mxu0 0.0
  %185 = vmatpush1.msra.mxu0 0.0
  %186 = vmatprep.subr.mxu0 0.0
  %187 = vmatpush1.msra.mxu0 0.0
  %188 = vmatprep.subr.mxu0 0.0
  %189 = vmatpush1.msra.mxu0 0.0
  %190 = vmatprep.subr.mxu0 0.0
  %191 = vmatpush1.msra.mxu0 0.0
  %192 = vmatprep.subr.mxu0 0.0
  %193 = vmatpush1.msra.mxu0 0.0
  %194 = vmatprep.subr.mxu0 0.0
  %195 = vmatpush1.msra.mxu0 0.0
  %196 = vmatprep.subr.mxu0 0.0
  %197 = vmatpush1.msra.mxu0 0.0
  %198 = vmatprep.subr.mxu0 0.0
  %199 = vmatpush1.msra.mxu0 0.0
  %200 = vmatprep.mubr.f32.mxu0 0.0
  %201 = vmatmul.mubr.f32.gmra.mrb[0].mxu0 %v131
  %v202 = vpop.f32.mrb[0].mxu0
  %v203 = vadd.f32 0.0, %v202
  %v204 = vpop.f32.mrb[0].mxu0
  %205 = vmatprep.mubr.f32.mxu0 0.0
  %206 = vmatmul.mubr.f32.gmra.mrb[0].mxu0 %v134
  %v207 = vpop.f32.mrb[0].mxu0
  %v208 = vadd.f32 0.0, %v207
  %v209 = vpop.f32.mrb[0].mxu0
  %210 = vdwg.mxu0
  %v212 = vsel %vm129, %v43, 0
  %v215 = vsel %vm129, %v44, 0
  %217 = vmatprep.subr.mxu0 0.0
  %218 = vmatpush1.msra.mxu0 %v45
  %219 = vmatprep.subr.mxu0 0.0
  %220 = vmatpush1.msra.mxu0 0.0
  %221 = vmatprep.subr.mxu0 0.0
  %222 = vmatpush1.msra.mxu0 0.0
  %223 = vmatprep.subr.mxu0 0.0
  %224 = vmatpush1.msra.mxu0 0.0
  %225 = vmatprep.subr.mxu0 0.0
  %226 = vmatpush1.msra.mxu0 0.0
  %227 = vmatprep.subr.mxu0 0.0
  %228 = vmatpush1.msra.mxu0 0.0
  %229 = vmatprep.subr.mxu0 0.0
  %230 = vmatpush1.msra.mxu0 0.0
  %231 = vmatprep.subr.mxu0 0.0
  %232 = vmatpush1.msra.mxu0 0.0
  %233 = vmatprep.subr.mxu0 0.0
  %234 = vmatpush1.msra.mxu0 0.0
  %235 = vmatprep.subr.mxu0 0.0
  %236 = vmatpush1.msra.mxu0 0.0
  %237 = vmatprep.subr.mxu0 0.0
  %238 = vmatpush1.msra.mxu0 0.0
  %239 = vmatprep.subr.mxu0 0.0
  %240 = vmatpush1.msra.mxu0 0.0
  %241 = vmatprep.subr.mxu0 0.0
  %242 = vmatpush1.msra.mxu0 0.0
  %243 = vmatprep.subr.mxu0 0.0
  %244 = vmatpush1.msra.mxu0 0.0
  %245 = vmatprep.subr.mxu0 0.0
  %246 = vmatpush1.msra.mxu0 0.0
  %247 = vmatprep.subr.mxu0 0.0
  %248 = vmatpush1.msra.mxu0 0.0
  %249 = vmatprep.subr.mxu0 0.0
  %250 = vmatpush1.msra.mxu0 0.0
  %251 = vmatprep.subr.mxu0 0.0
  %252 = vmatpush1.msra.mxu0 0.0
  %253 = vmatprep.subr.mxu0 0.0
  %254 = vmatpush1.msra.mxu0 0.0
  %255 = vmatprep.subr.mxu0 0.0
  %256 = vmatpush1.msra.mxu0 0.0
  %257 = vmatprep.subr.mxu0 0.0
  %258 = vmatpush1.msra.mxu0 0.0
  %259 = vmatprep.subr.mxu0 0.0
  %260 = vmatpush1.msra.mxu0 0.0
  %261 = vmatprep.subr.mxu0 0.0
  %262 = vmatpush1.msra.mxu0 0.0
  %263 = vmatprep.subr.mxu0 0.0
  %264 = vmatpush1.msra.mxu0 0.0
  %265 = vmatprep.subr.mxu0 0.0
  %266 = vmatpush1.msra.mxu0 0.0
  %267 = vmatprep.subr.mxu0 0.0
  %268 = vmatpush1.msra.mxu0 0.0
  %269 = vmatprep.subr.mxu0 0.0
  %270 = vmatpush1.msra.mxu0 0.0
  %271 = vmatprep.subr.mxu0 0.0
  %272 = vmatpush1.msra.mxu0 0.0
  %273 = vmatprep.subr.mxu0 0.0
  %274 = vmatpush1.msra.mxu0 0.0
  %275 = vmatprep.subr.mxu0 0.0
  %276 = vmatpush1.msra.mxu0 0.0
  %277 = vmatprep.subr.mxu0 0.0
  %278 = vmatpush1.msra.mxu0 0.0
  %279 = vmatprep.subr.mxu0 0.0
  %280 = vmatpush1.msra.mxu0 0.0
  %281 = vmatprep.mubr.f32.mxu0 0.0
  %282 = vmatmul.mubr.f32.gmra.mrb[0].mxu0 %v212
  %v283 = vpop.f32.mrb[0].mxu0
  %v284 = vadd.f32 %v203, %v283
  %v285 = vpop.f32.mrb[0].mxu0
  %286 = vmatprep.mubr.f32.mxu0 0.0
  %287 = vmatmul.mubr.f32.gmra.mrb[0].mxu0 %v215
  %v288 = vpop.f32.mrb[0].mxu0
  %v289 = vadd.f32 %v208, %v288
  %v290 = vpop.f32.mrb[0].mxu0
  %291 = vdwg.mxu0
  %292 = vmatprep.subr.mxu0 0.0
  %293 = vmatpush1.msra.mxu0 %v120
  %294 = vmatprep.subr.mxu0 0.0
  %295 = vmatpush1.msra.mxu0 %v125
  %296 = vmatprep.subr.mxu0 0.0
  %297 = vmatpush1.msra.mxu0 0.0
  %298 = vmatprep.subr.mxu0 0.0
  %299 = vmatpush1.msra.mxu0 0.0
  %300 = vmatprep.subr.mxu0 0.0
  %301 = vmatpush1.msra.mxu0 0.0
  %302 = vmatprep.subr.mxu0 0.0
  %303 = vmatpush1.msra.mxu0 0.0
  %304 = vmatprep.subr.mxu0 0.0
  %305 = vmatpush1.msra.mxu0 0.0
  %306 = vmatprep.subr.mxu0 0.0
  %307 = vmatpush1.msra.mxu0 0.0
  %308 = vmatprep.subr.mxu0 0.0
  %309 = vmatpush1.msra.mxu0 0.0
  %310 = vmatprep.subr.mxu0 0.0
  %311 = vmatpush1.msra.mxu0 0.0
  %312 = vmatprep.subr.mxu0 0.0
  %313 = vmatpush1.msra.mxu0 0.0
  %314 = vmatprep.subr.mxu0 0.0
  %315 = vmatpush1.msra.mxu0 0.0
  %316 = vmatprep.subr.mxu0 0.0
  %317 = vmatpush1.msra.mxu0 0.0
  %318 = vmatprep.subr.mxu0 0.0
  %319 = vmatpush1.msra.mxu0 0.0
  %320 = vmatprep.subr.mxu0 0.0
  %321 = vmatpush1.msra.mxu0 0.0
  %322 = vmatprep.subr.mxu0 0.0
  %323 = vmatpush1.msra.mxu0 0.0
  %324 = vmatprep.subr.mxu0 0.0
  %325 = vmatpush1.msra.mxu0 0.0
  %326 = vmatprep.subr.mxu0 0.0
  %327 = vmatpush1.msra.mxu0 0.0
  %328 = vmatprep.subr.mxu0 0.0
  %329 = vmatpush1.msra.mxu0 0.0
  %330 = vmatprep.subr.mxu0 0.0
  %331 = vmatpush1.msra.mxu0 0.0
  %332 = vmatprep.subr.mxu0 0.0
  %333 = vmatpush1.msra.mxu0 0.0
  %334 = vmatprep.subr.mxu0 0.0
  %335 = vmatpush1.msra.mxu0 0.0
  %336 = vmatprep.subr.mxu0 0.0
  %337 = vmatpush1.msra.mxu0 0.0
  %338 = vmatprep.subr.mxu0 0.0
  %339 = vmatpush1.msra.mxu0 0.0
  %340 = vmatprep.subr.mxu0 0.0
  %341 = vmatpush1.msra.mxu0 0.0
  %342 = vmatprep.subr.mxu0 0.0
  %343 = vmatpush1.msra.mxu0 0.0
  %344 = vmatprep.subr.mxu0 0.0
  %345 = vmatpush1.msra.mxu0 0.0
  %346 = vmatprep.subr.mxu0 0.0
  %347 = vmatpush1.msra.mxu0 0.0
  %348 = vmatprep.subr.mxu0 0.0
  %349 = vmatpush1.msra.mxu0 0.0
  %350 = vmatprep.subr.mxu0 0.0
  %351 = vmatpush1.msra.mxu0 0.0
  %352 = vmatprep.subr.mxu0 0.0
  %353 = vmatpush1.msra.mxu0 0.0
  %354 = vmatprep.subr.mxu0 0.0
  %355 = vmatpush1.msra.mxu0 0.0
  %356 = vmatprep.mubr.f32.mxu0 0.0
  %357 = vmatmul.mubr.f32.gmra.mrb[0].mxu0 %v48
  %v358 = vpop.f32.mrb[0].mxu0
  %v359 = vadd.f32 0.0, %v358
  %v360 = vpop.f32.mrb[0].mxu0
  %361 = vmatprep.mubr.f32.mxu0 0.0
  %362 = vmatmul.mubr.f32.gmra.mrb[0].mxu0 %v51
  %v363 = vpop.f32.mrb[0].mxu0
  %v364 = vadd.f32 0.0, %v363
  %v365 = vpop.f32.mrb[0].mxu0
  %366 = vdwg.mxu0
  %v367 = vld [vmem:[%s2 + $0x10] sm:$0xff]
  %v369 = vsel %vm129, %v359, 0
  %v372 = vsel %vm129, %v364, 0
  %374 = vmatprep.subr.mxu0 0.0
  %375 = vmatpush1.msra.mxu0 %v367
  %376 = vmatprep.subr.mxu0 0.0
  %377 = vmatpush1.msra.mxu0 0.0
  %378 = vmatprep.subr.mxu0 0.0
  %379 = vmatpush1.msra.mxu0 0.0
  %380 = vmatprep.subr.mxu0 0.0
  %381 = vmatpush1.msra.mxu0 0.0
  %382 = vmatprep.subr.mxu0 0.0
  %383 = vmatpush1.msra.mxu0 0.0
  %384 = vmatprep.subr.mxu0 0.0
  %385 = vmatpush1.msra.mxu0 0.0
  %386 = vmatprep.subr.mxu0 0.0
  %387 = vmatpush1.msra.mxu0 0.0
  %388 = vmatprep.subr.mxu0 0.0
  %389 = vmatpush1.msra.mxu0 0.0
  %390 = vmatprep.subr.mxu0 0.0
  %391 = vmatpush1.msra.mxu0 0.0
  %392 = vmatprep.subr.mxu0 0.0
  %393 = vmatpush1.msra.mxu0 0.0
  %394 = vmatprep.subr.mxu0 0.0
  %395 = vmatpush1.msra.mxu0 0.0
  %396 = vmatprep.subr.mxu0 0.0
  %397 = vmatpush1.msra.mxu0 0.0
  %398 = vmatprep.subr.mxu0 0.0
  %399 = vmatpush1.msra.mxu0 0.0
  %400 = vmatprep.subr.mxu0 0.0
  %401 = vmatpush1.msra.mxu0 0.0
  %402 = vmatprep.subr.mxu0 0.0
  %403 = vmatpush1.msra.mxu0 0.0
  %404 = vmatprep.subr.mxu0 0.0
  %405 = vmatpush1.msra.mxu0 0.0
  %406 = vmatprep.subr.mxu0 0.0
  %407 = vmatpush1.msra.mxu0 0.0
  %408 = vmatprep.subr.mxu0 0.0
  %409 = vmatpush1.msra.mxu0 0.0
  %410 = vmatprep.subr.mxu0 0.0
  %411 = vmatpush1.msra.mxu0 0.0
  %412 = vmatprep.subr.mxu0 0.0
  %413 = vmatpush1.msra.mxu0 0.0
  %414 = vmatprep.subr.mxu0 0.0
  %415 = vmatpush1.msra.mxu0 0.0
  %416 = vmatprep.subr.mxu0 0.0
  %417 = vmatpush1.msra.mxu0 0.0
  %418 = vmatprep.subr.mxu0 0.0
  %419 = vmatpush1.msra.mxu0 0.0
  %420 = vmatprep.subr.mxu0 0.0
  %421 = vmatpush1.msra.mxu0 0.0
  %422 = vmatprep.subr.mxu0 0.0
  %423 = vmatpush1.msra.mxu0 0.0
  %424 = vmatprep.subr.mxu0 0.0
  %425 = vmatpush1.msra.mxu0 0.0
  %426 = vmatprep.subr.mxu0 0.0
  %427 = vmatpush1.msra.mxu0 0.0
  %428 = vmatprep.subr.mxu0 0.0
  %429 = vmatpush1.msra.mxu0 0.0
  %430 = vmatprep.subr.mxu0 0.0
  %431 = vmatpush1.msra.mxu0 0.0
  %432 = vmatprep.subr.mxu0 0.0
  %433 = vmatpush1.msra.mxu0 0.0
  %434 = vmatprep.subr.mxu0 0.0
  %435 = vmatpush1.msra.mxu0 0.0
  %436 = vmatprep.subr.mxu0 0.0
  %437 = vmatpush1.msra.mxu0 0.0
  %438 = vmatprep.mubr.f32.mxu0 0.0
  %439 = vmatmul.mubr.f32.gmra.mrb[0].mxu0 %v369
  %v440 = vpop.f32.mrb[0].mxu0
  %v441 = vadd.f32 0.0, %v440
  %v442 = vpop.f32.mrb[0].mxu0
  %443 = vmatprep.mubr.f32.mxu0 0.0
  %444 = vmatmul.mubr.f32.gmra.mrb[0].mxu0 %v372
  %v445 = vpop.f32.mrb[0].mxu0
  %v446 = vadd.f32 0.0, %v445
  %v447 = vpop.f32.mrb[0].mxu0
  %448 = vdwg.mxu0
  %v449 = vadd.f32 %v284, %v441
  %v450 = vadd.f32 %v289, %v446
  %v451 = vld [vmem:[%s3] sm:$0x1]
  %v453 = vlaneseq
  %v454 = vshrl.u32 %v453, 7
  %v455 = vsub.s32 0, %v454
  %v456 = vrot.slane %v451, %v455
  %v458 = vadd.f32 %v449, %v456
  %v459 = vadd.f32 %v450, %v456
  %v460 = vtanh.pop %v458
  %v461 = vtanh.pop %v459
  %v462 = vld [vmem:[%s4] sm:$0xff]
  %v463 = vld [vmem:[%s4 + $0x8] sm:$0xff]
  %v464 = vld [vmem:[%s4 + $0x10] sm:$0xff]
  %v465 = vld [vmem:[%s4 + $0x18] sm:$0xff]
  %v466 = vld [vmem:[%s4 + $0x20] sm:$0xff]
  %v467 = vld [vmem:[%s4 + $0x28] sm:$0xff]
  %468 = vmatprep.subr.mxu0 0.0
  %469 = vmatpush1.msra.mxu0 %v460
  %470 = vmatprep.subr.mxu0 0.0
  %471 = vmatpush1.msra.mxu0 %v461
  %472 = vmatprep.subr.mxu0 0.0
  %473 = vmatpush1.msra.mxu0 0.0
  %474 = vmatprep.subr.mxu0 0.0
  %475 = vmatpush1.msra.mxu0 0.0
  %476 = vmatprep.subr.mxu0 0.0
  %477 = vmatpush1.msra.mxu0 0.0
  %478 = vmatprep.subr.mxu0 0.0
  %479 = vmatpush1.msra.mxu0 0.0
  %480 = vmatprep.subr.mxu0 0.0
  %481 = vmatpush1.msra.mxu0 0.0
  %482 = vmatprep.subr.mxu0 0.0
  %483 = vmatpush1.msra.mxu0 0.0
  %484 = vmatprep.subr.mxu0 0.0
  %485 = vmatpush1.msra.mxu0 0.0
  %486 = vmatprep.subr.mxu0 0.0
  %487 = vmatpush1.msra.mxu0 0.0
  %488 = vmatprep.subr.mxu0 0.0
  %489 = vmatpush1.msra.mxu0 0.0
  %490 = vmatprep.subr.mxu0 0.0
  %491 = vmatpush1.msra.mxu0 0.0
  %492 = vmatprep.subr.mxu0 0.0
  %493 = vmatpush1.msra.mxu0 0.0
  %494 = vmatprep.subr.mxu0 0.0
  %495 = vmatpush1.msra.mxu0 0.0
  %496 = vmatprep.subr.mxu0 0.0
  %497 = vmatpush1.msra.mxu0 0.0
  %498 = vmatprep.subr.mxu0 0.0
  %499 = vmatpush1.msra.mxu0 0.0
  %500 = vmatprep.subr.mxu0 0.0
  %501 = vmatpush1.msra.mxu0 0.0
  %502 = vmatprep.subr.mxu0 0.0
  %503 = vmatpush1.msra.mxu0 0.0
  %504 = vmatprep.subr.mxu0 0.0
  %505 = vmatpush1.msra.mxu0 0.0
  %506 = vmatprep.subr.mxu0 0.0
  %507 = vmatpush1.msra.mxu0 0.0
  %508 = vmatprep.subr.mxu0 0.0
  %509 = vmatpush1.msra.mxu0 0.0
  %510 = vmatprep.subr.mxu0 0.0
  %511 = vmatpush1.msra.mxu0 0.0
  %512 = vmatprep.subr.mxu0 0.0
  %513 = vmatpush1.msra.mxu0 0.0
  %514 = vmatprep.subr.mxu0 0.0
  %515 = vmatpush1.msra.mxu0 0.0
  %516 = vmatprep.subr.mxu0 0.0
  %517 = vmatpush1.msra.mxu0 0.0
  %518 = vmatprep.subr.mxu0 0.0
  %519 = vmatpush1.msra.mxu0 0.0
  %520 = vmatprep.subr.mxu0 0.0
  %521 = vmatpush1.msra.mxu0 0.0
  %522 = vmatprep.subr.mxu0 0.0
  %523 = vmatpush1.msra.mxu0 0.0
  %524 = vmatprep.subr.mxu0 0.0
  %525 = vmatpush1.msra.mxu0 0.0
  %526 = vmatprep.subr.mxu0 0.0
  %527 = vmatpush1.msra.mxu0 0.0
  %528 = vmatprep.subr.mxu0 0.0
  %529 = vmatpush1.msra.mxu0 0.0
  %530 = vmatprep.subr.mxu0 0.0
  %531 = vmatpush1.msra.mxu0 0.0
  %532 = vmatprep.mubr.f32.mxu0 0.0
  %533 = vmatmul.mubr.f32.gmra.mrb[0].mxu0 %v48
  %v534 = vpop.f32.mrb[0].mxu0
  %v535 = vadd.f32 0.0, %v534
  %v536 = vpop.f32.mrb[0].mxu0
  %537 = vmatprep.mubr.f32.mxu0 0.0
  %538 = vmatmul.mubr.f32.gmra.mrb[0].mxu0 %v51
  %v539 = vpop.f32.mrb[0].mxu0
  %v540 = vadd.f32 0.0, %v539
  %v541 = vpop.f32.mrb[0].mxu0
  %542 = vdwg.mxu0
  %v543 = vld [vmem:[%s4 + $0x30] sm:$0xff]
  %v544 = vld [vmem:[%s4 + $0x38] sm:$0xff]
  %v545 = vld [vmem:[%s4 + $0x40] sm:$0xff]
  %v546 = vld [vmem:[%s4 + $0x48] sm:$0xff]
  %v547 = vld [vmem:[%s4 + $0x50] sm:$0xff]
  %v548 = vld [vmem:[%s4 + $0x58] sm:$0xff]
  %vm549 = vcmask 392192
  %v551 = vsel %vm549, %v535, 0
  %v554 = vsel %vm549, %v540, 0
  %556 = vmatprep.subr.mxu0 0.0
  %557 = vmatpush1.msra.mxu0 %v543
  %558 = vmatprep.subr.mxu0 0.0
  %559 = vmatpush1.msra.mxu0 %v544
  %560 = vmatprep.subr.mxu0 0.0
  %561 = vmatpush1.msra.mxu0 %v545
  %562 = vmatprep.subr.mxu0 0.0
  %563 = vmatpush1.msra.mxu0 %v546
  %564 = vmatprep.subr.mxu0 0.0
  %565 = vmatpush1.msra.mxu0 %v547
  %566 = vmatprep.subr.mxu0 0.0
  %567 = vmatpush1.msra.mxu0 %v548
  %568 = vmatprep.subr.mxu0 0.0
  %569 = vmatpush1.msra.mxu0 0.0
  %570 = vmatprep.subr.mxu0 0.0
  %571 = vmatpush1.msra.mxu0 0.0
  %572 = vmatprep.subr.mxu0 0.0
  %573 = vmatpush1.msra.mxu0 0.0
  %574 = vmatprep.subr.mxu0 0.0
  %575 = vmatpush1.msra.mxu0 0.0
  %576 = vmatprep.subr.mxu0 0.0
  %577 = vmatpush1.msra.mxu0 0.0
  %578 = vmatprep.subr.mxu0 0.0
  %579 = vmatpush1.msra.mxu0 0.0
  %580 = vmatprep.subr.mxu0 0.0
  %581 = vmatpush1.msra.mxu0 0.0
  %582 = vmatprep.subr.mxu0 0.0
  %583 = vmatpush1.msra.mxu0 0.0
  %584 = vmatprep.subr.mxu0 0.0
  %585 = vmatpush1.msra.mxu0 0.0
  %586 = vmatprep.subr.mxu0 0.0
  %587 = vmatpush1.msra.mxu0 0.0
  %588 = vmatprep.subr.mxu0 0.0
  %589 = vmatpush1.msra.mxu0 0.0
  %590 = vmatprep.subr.mxu0 0.0
  %591 = vmatpush1.msra.mxu0 0.0
  %592 = vmatprep.subr.mxu0 0.0
  %593 = vmatpush1.msra.mxu0 0.0
  %594 = vmatprep.subr.mxu0 0.0
  %595 = vmatpush1.msra.mxu0 0.0
  %596 = vmatprep.subr.mxu0 0.0
  %597 = vmatpush1.msra.mxu0 0.0
  %598 = vmatprep.subr.mxu0 0.0
  %599 = vmatpush1.msra.mxu0 0.0
  %600 = vmatprep.subr.mxu0 0.0
  %601 = vmatpush1.msra.mxu0 0.0
  %602 = vmatprep.subr.mxu0 0.0
  %603 = vmatpush1.msra.mxu0 0.0
  %604 = vmatprep.subr.mxu0 0.0
  %605 = vmatpush1.msra.mxu0 0.0
  %606 = vmatprep.subr.mxu0 0.0
  %607 = vmatpush1.msra.mxu0 0.0
  %608 = vmatprep.subr.mxu0 0.0
  %609 = vmatpush1.msra.mxu0 0.0
  %610 = vmatprep.subr.mxu0 0.0
  %611 = vmatpush1.msra.mxu0 0.0
  %612 = vmatprep.subr.mxu0 0.0
  %613 = vmatpush1.msra.mxu0 0.0
  %614 = vmatprep.subr.mxu0 0.0
  %615 = vmatpush1.msra.mxu0 0.0
  %616 = vmatprep.subr.mxu0 0.0
  %617 = vmatpush1.msra.mxu0 0.0
  %618 = vmatprep.subr.mxu0 0.0
  %619 = vmatpush1.msra.mxu0 0.0
  %620 = vmatprep.mubr.f32.mxu0 0.0
  %621 = vmatmul.mubr.f32.gmra.mrb[0].mxu0 %v551
  %v622 = vpop.f32.mrb[0].mxu0
  %v623 = vadd.f32 0.0, %v622
  %v624 = vpop.f32.mrb[0].mxu0
  %625 = vmatprep.mubr.f32.mxu0 0.0
  %626 = vmatmul.mubr.f32.gmra.mrb[0].mxu0 %v554
  %v627 = vpop.f32.mrb[0].mxu0
  %v628 = vadd.f32 0.0, %v627
  %v629 = vpop.f32.mrb[0].mxu0
  %630 = vdwg.mxu0
  %v632 = vsel %vm549, %v460, 0
  %v635 = vsel %vm549, %v461, 0
  %637 = vmatprep.subr.mxu0 0.0
  %638 = vmatpush1.msra.mxu0 %v462
  %639 = vmatprep.subr.mxu0 0.0
  %640 = vmatpush1.msra.mxu0 %v463
  %641 = vmatprep.subr.mxu0 0.0
  %642 = vmatpush1.msra.mxu0 %v464
  %643 = vmatprep.subr.mxu0 0.0
  %644 = vmatpush1.msra.mxu0 %v465
  %645 = vmatprep.subr.mxu0 0.0
  %646 = vmatpush1.msra.mxu0 %v466
  %647 = vmatprep.subr.mxu0 0.0
  %648 = vmatpush1.msra.mxu0 %v467
  %649 = vmatprep.subr.mxu0 0.0
  %650 = vmatpush1.msra.mxu0 0.0
  %651 = vmatprep.subr.mxu0 0.0
  %652 = vmatpush1.msra.mxu0 0.0
  %653 = vmatprep.subr.mxu0 0.0
  %654 = vmatpush1.msra.mxu0 0.0
  %655 = vmatprep.subr.mxu0 0.0
  %656 = vmatpush1.msra.mxu0 0.0
  %657 = vmatprep.subr.mxu0 0.0
  %658 = vmatpush1.msra.mxu0 0.0
  %659 = vmatprep.subr.mxu0 0.0
  %660 = vmatpush1.msra.mxu0 0.0
  %661 = vmatprep.subr.mxu0 0.0
  %662 = vmatpush1.msra.mxu0 0.0
  %663 = vmatprep.subr.mxu0 0.0
  %664 = vmatpush1.msra.mxu0 0.0
  %665 = vmatprep.subr.mxu0 0.0
  %666 = vmatpush1.msra.mxu0 0.0
  %667 = vmatprep.subr.mxu0 0.0
  %668 = vmatpush1.msra.mxu0 0.0
  %669 = vmatprep.subr.mxu0 0.0
  %670 = vmatpush1.msra.mxu0 0.0
  %671 = vmatprep.subr.mxu0 0.0
  %672 = vmatpush1.msra.mxu0 0.0
  %673 = vmatprep.subr.mxu0 0.0
  %674 = vmatpush1.msra.mxu0 0.0
  %675 = vmatprep.subr.mxu0 0.0
  %676 = vmatpush1.msra.mxu0 0.0
  %677 = vmatprep.subr.mxu0 0.0
  %678 = vmatpush1.msra.mxu0 0.0
  %679 = vmatprep.subr.mxu0 0.0
  %680 = vmatpush1.msra.mxu0 0.0
  %681 = vmatprep.subr.mxu0 0.0
  %682 = vmatpush1.msra.mxu0 0.0
  %683 = vmatprep.subr.mxu0 0.0
  %684 = vmatpush1.msra.mxu0 0.0
  %685 = vmatprep.subr.mxu0 0.0
  %686 = vmatpush1.msra.mxu0 0.0
  %687 = vmatprep.subr.mxu0 0.0
  %688 = vmatpush1.msra.mxu0 0.0
  %689 = vmatprep.subr.mxu0 0.0
  %690 = vmatpush1.msra.mxu0 0.0
  %691 = vmatprep.subr.mxu0 0.0
  %692 = vmatpush1.msra.mxu0 0.0
  %693 = vmatprep.subr.mxu0 0.0
  %694 = vmatpush1.msra.mxu0 0.0
  %695 = vmatprep.subr.mxu0 0.0
  %696 = vmatpush1.msra.mxu0 0.0
  %697 = vmatprep.subr.mxu0 0.0
  %698 = vmatpush1.msra.mxu0 0.0
  %699 = vmatprep.subr.mxu0 0.0
  %700 = vmatpush1.msra.mxu0 0.0
  %701 = vmatprep.mubr.f32.mxu0 0.0
  %702 = vmatmul.mubr.f32.gmra.mrb[0].mxu0 %v632
  %v703 = vpop.f32.mrb[0].mxu0
  %v704 = vadd.f32 %v623, %v703
  %v705 = vpop.f32.mrb[0].mxu0
  %706 = vmatprep.mubr.f32.mxu0 0.0
  %707 = vmatmul.mubr.f32.gmra.mrb[0].mxu0 %v635
  %v708 = vpop.f32.mrb[0].mxu0
  %v709 = vadd.f32 %v628, %v708
  %v710 = vpop.f32.mrb[0].mxu0
  %711 = vdwg.mxu0
  %712 = vmatprep.subr.mxu0 0.0
  %713 = vmatpush1.msra.mxu0 %v535
  %714 = vmatprep.subr.mxu0 0.0
  %715 = vmatpush1.msra.mxu0 %v540
  %716 = vmatprep.subr.mxu0 0.0
  %717 = vmatpush1.msra.mxu0 0.0
  %718 = vmatprep.subr.mxu0 0.0
  %719 = vmatpush1.msra.mxu0 0.0
  %720 = vmatprep.subr.mxu0 0.0
  %721 = vmatpush1.msra.mxu0 0.0
  %722 = vmatprep.subr.mxu0 0.0
  %723 = vmatpush1.msra.mxu0 0.0
  %724 = vmatprep.subr.mxu0 0.0
  %725 = vmatpush1.msra.mxu0 0.0
  %726 = vmatprep.subr.mxu0 0.0
  %727 = vmatpush1.msra.mxu0 0.0
  %728 = vmatprep.subr.mxu0 0.0
  %729 = vmatpush1.msra.mxu0 0.0
  %730 = vmatprep.subr.mxu0 0.0
  %731 = vmatpush1.msra.mxu0 0.0
  %732 = vmatprep.subr.mxu0 0.0
  %733 = vmatpush1.msra.mxu0 0.0
  %734 = vmatprep.subr.mxu0 0.0
  %735 = vmatpush1.msra.mxu0 0.0
  %736 = vmatprep.subr.mxu0 0.0
  %737 = vmatpush1.msra.mxu0 0.0
  %738 = vmatprep.subr.mxu0 0.0
  %739 = vmatpush1.msra.mxu0 0.0
  %740 = vmatprep.subr.mxu0 0.0
  %741 = vmatpush1.msra.mxu0 0.0
  %742 = vmatprep.subr.mxu0 0.0
  %743 = vmatpush1.msra.mxu0 0.0
  %744 = vmatprep.subr.mxu0 0.0
  %745 = vmatpush1.msra.mxu0 0.0
  %746 = vmatprep.subr.mxu0 0.0
  %747 = vmatpush1.msra.mxu0 0.0
  %748 = vmatprep.subr.mxu0 0.0
  %749 = vmatpush1.msra.mxu0 0.0
  %750 = vmatprep.subr.mxu0 0.0
  %751 = vmatpush1.msra.mxu0 0.0
  %752 = vmatprep.subr.mxu0 0.0
  %753 = vmatpush1.msra.mxu0 0.0
  %754 = vmatprep.subr.mxu0 0.0
  %755 = vmatpush1.msra.mxu0 0.0
  %756 = vmatprep.subr.mxu0 0.0
  %757 = vmatpush1.msra.mxu0 0.0
  %758 = vmatprep.subr.mxu0 0.0
  %759 = vmatpush1.msra.mxu0 0.0
  %760 = vmatprep.subr.mxu0 0.0
  %761 = vmatpush1.msra.mxu0 0.0
  %762 = vmatprep.subr.mxu0 0.0
  %763 = vmatpush1.msra.mxu0 0.0
  %764 = vmatprep.subr.mxu0 0.0
  %765 = vmatpush1.msra.mxu0 0.0
  %766 = vmatprep.subr.mxu0 0.0
  %767 = vmatpush1.msra.mxu0 0.0
  %768 = vmatprep.subr.mxu0 0.0
  %769 = vmatpush1.msra.mxu0 0.0
  %770 = vmatprep.subr.mxu0 0.0
  %771 = vmatpush1.msra.mxu0 0.0
  %772 = vmatprep.subr.mxu0 0.0
  %773 = vmatpush1.msra.mxu0 0.0
  %774 = vmatprep.subr.mxu0 0.0
  %775 = vmatpush1.msra.mxu0 0.0
  %776 = vmatprep.mubr.f32.mxu0 0.0
  %777 = vmatmul.mubr.f32.gmra.mrb[0].mxu0 %v48
  %v778 = vpop.f32.mrb[0].mxu0
  %v779 = vadd.f32 0.0, %v778
  %v780 = vpop.f32.mrb[0].mxu0
  %781 = vmatprep.mubr.f32.mxu0 0.0
  %782 = vmatmul.mubr.f32.gmra.mrb[0].mxu0 %v51
  %v783 = vpop.f32.mrb[0].mxu0
  %v784 = vadd.f32 0.0, %v783
  %v785 = vpop.f32.mrb[0].mxu0
  %786 = vdwg.mxu0
  %v787 = vld [vmem:[%s4 + $0x60] sm:$0xff]
  %v788 = vld [vmem:[%s4 + $0x68] sm:$0xff]
  %v789 = vld [vmem:[%s4 + $0x70] sm:$0xff]
  %v790 = vld [vmem:[%s4 + $0x78] sm:$0xff]
  %v791 = vld [vmem:[%s4 + $0x80] sm:$0xff]
  %v792 = vld [vmem:[%s4 + $0x88] sm:$0xff]
  %v794 = vsel %vm549, %v779, 0
  %v797 = vsel %vm549, %v784, 0
  %799 = vmatprep.subr.mxu0 0.0
  %800 = vmatpush1.msra.mxu0 %v787
  %801 = vmatprep.subr.mxu0 0.0
  %802 = vmatpush1.msra.mxu0 %v788
  %803 = vmatprep.subr.mxu0 0.0
  %804 = vmatpush1.msra.mxu0 %v789
  %805 = vmatprep.subr.mxu0 0.0
  %806 = vmatpush1.msra.mxu0 %v790
  %807 = vmatprep.subr.mxu0 0.0
  %808 = vmatpush1.msra.mxu0 %v791
  %809 = vmatprep.subr.mxu0 0.0
  %810 = vmatpush1.msra.mxu0 %v792
  %811 = vmatprep.subr.mxu0 0.0
  %812 = vmatpush1.msra.mxu0 0.0
  %813 = vmatprep.subr.mxu0 0.0
  %814 = vmatpush1.msra.mxu0 0.0
  %815 = vmatprep.subr.mxu0 0.0
  %816 = vmatpush1.msra.mxu0 0.0
  %817 = vmatprep.subr.mxu0 0.0
  %818 = vmatpush1.msra.mxu0 0.0
  %819 = vmatprep.subr.mxu0 0.0
  %820 = vmatpush1.msra.mxu0 0.0
  %821 = vmatprep.subr.mxu0 0.0
  %822 = vmatpush1.msra.mxu0 0.0
  %823 = vmatprep.subr.mxu0 0.0
  %824 = vmatpush1.msra.mxu0 0.0
  %825 = vmatprep.subr.mxu0 0.0
  %826 = vmatpush1.msra.mxu0 0.0
  %827 = vmatprep.subr.mxu0 0.0
  %828 = vmatpush1.msra.mxu0 0.0
  %829 = vmatprep.subr.mxu0 0.0
  %830 = vmatpush1.msra.mxu0 0.0
  %831 = vmatprep.subr.mxu0 0.0
  %832 = vmatpush1.msra.mxu0 0.0
  %833 = vmatprep.subr.mxu0 0.0
  %834 = vmatpush1.msra.mxu0 0.0
  %835 = vmatprep.subr.mxu0 0.0
  %836 = vmatpush1.msra.mxu0 0.0
  %837 = vmatprep.subr.mxu0 0.0
  %838 = vmatpush1.msra.mxu0 0.0
  %839 = vmatprep.subr.mxu0 0.0
  %840 = vmatpush1.msra.mxu0 0.0
  %841 = vmatprep.subr.mxu0 0.0
  %842 = vmatpush1.msra.mxu0 0.0
  %843 = vmatprep.subr.mxu0 0.0
  %844 = vmatpush1.msra.mxu0 0.0
  %845 = vmatprep.subr.mxu0 0.0
  %846 = vmatpush1.msra.mxu0 0.0
  %847 = vmatprep.subr.mxu0 0.0
  %848 = vmatpush1.msra.mxu0 0.0
  %849 = vmatprep.subr.mxu0 0.0
  %850 = vmatpush1.msra.mxu0 0.0
  %851 = vmatprep.subr.mxu0 0.0
  %852 = vmatpush1.msra.mxu0 0.0
  %853 = vmatprep.subr.mxu0 0.0
  %854 = vmatpush1.msra.mxu0 0.0
  %855 = vmatprep.subr.mxu0 0.0
  %856 = vmatpush1.msra.mxu0 0.0
  %857 = vmatprep.subr.mxu0 0.0
  %858 = vmatpush1.msra.mxu0 0.0
  %859 = vmatprep.subr.mxu0 0.0
  %860 = vmatpush1.msra.mxu0 0.0
  %861 = vmatprep.subr.mxu0 0.0
  %862 = vmatpush1.msra.mxu0 0.0
  %863 = vmatprep.mubr.f32.mxu0 0.0
  %864 = vmatmul.mubr.f32.gmra.mrb[0].mxu0 %v794
  %v865 = vpop.f32.mrb[0].mxu0
  %v866 = vadd.f32 0.0, %v865
  %v867 = vpop.f32.mrb[0].mxu0
  %868 = vmatprep.mubr.f32.mxu0 0.0
  %869 = vmatmul.mubr.f32.gmra.mrb[0].mxu0 %v797
  %v870 = vpop.f32.mrb[0].mxu0
  %v871 = vadd.f32 0.0, %v870
  %v872 = vpop.f32.mrb[0].mxu0
  %873 = vdwg.mxu0
  %v874 = vadd.f32 %v704, %v866
  %v875 = vadd.f32 %v709, %v871
  %v876 = vld [vmem:[%s5] sm:$0x1]
  %v878 = vlaneseq
  %v879 = vshrl.u32 %v878, 7
  %v880 = vsub.s32 0, %v879
  %v881 = vrot.slane %v876, %v880
  %v883 = vadd.f32 %v874, %v881
  %v884 = vadd.f32 %v875, %v881
  %v885 = vtanh.pop %v883
  %v886 = vtanh.pop %v884
  %v887 = vld [vmem:[%s6] sm:$0xff]
  %v888 = vld [vmem:[%s6 + $0x8] sm:$0xff]
  %v889 = vld [vmem:[%s6 + $0x10] sm:$0xff]
  %v890 = vld [vmem:[%s6 + $0x18] sm:$0xff]
  %v891 = vld [vmem:[%s6 + $0x20] sm:$0xff]
  %v892 = vld [vmem:[%s6 + $0x28] sm:$0xff]
  %v893 = vld [vmem:[%s7] sm:$0x1]
  %v895 = vlaneseq
  %v896 = vshrl.u32 %v895, 7
  %v897 = vsub.s32 0, %v896
  %v898 = vrot.slane %v893, %v897
  %v901 = vsel %vm549, %v885, 0
  %v904 = vsel %vm549, %v886, 0
  %906 = vmatprep.subr.mxu0 0.0
  %907 = vmatpush1.msra.mxu0 %v887
  %908 = vmatprep.subr.mxu0 0.0
  %909 = vmatpush1.msra.mxu0 %v888
  %910 = vmatprep.subr.mxu0 0.0
  %911 = vmatpush1.msra.mxu0 %v889
  %912 = vmatprep.subr.mxu0 0.0
  %913 = vmatpush1.msra.mxu0 %v890
  %914 = vmatprep.subr.mxu0 0.0
  %915 = vmatpush1.msra.mxu0 %v891
  %916 = vmatprep.subr.mxu0 0.0
  %917 = vmatpush1.msra.mxu0 %v892
  %918 = vmatprep.subr.mxu0 0.0
  %919 = vmatpush1.msra.mxu0 0.0
  %920 = vmatprep.subr.mxu0 0.0
  %921 = vmatpush1.msra.mxu0 0.0
  %922 = vmatprep.subr.mxu0 0.0
  %923 = vmatpush1.msra.mxu0 0.0
  %924 = vmatprep.subr.mxu0 0.0
  %925 = vmatpush1.msra.mxu0 0.0
  %926 = vmatprep.subr.mxu0 0.0
  %927 = vmatpush1.msra.mxu0 0.0
  %928 = vmatprep.subr.mxu0 0.0
  %929 = vmatpush1.msra.mxu0 0.0
  %930 = vmatprep.subr.mxu0 0.0
  %931 = vmatpush1.msra.mxu0 0.0
  %932 = vmatprep.subr.mxu0 0.0
  %933 = vmatpush1.msra.mxu0 0.0
  %934 = vmatprep.subr.mxu0 0.0
  %935 = vmatpush1.msra.mxu0 0.0
  %936 = vmatprep.subr.mxu0 0.0
  %937 = vmatpush1.msra.mxu0 0.0
  %938 = vmatprep.subr.mxu0 0.0
  %939 = vmatpush1.msra.mxu0 0.0
  %940 = vmatprep.subr.mxu0 0.0
  %941 = vmatpush1.msra.mxu0 0.0
  %942 = vmatprep.subr.mxu0 0.0
  %943 = vmatpush1.msra.mxu0 0.0
  %944 = vmatprep.subr.mxu0 0.0
  %945 = vmatpush1.msra.mxu0 0.0
  %946 = vmatprep.subr.mxu0 0.0
  %947 = vmatpush1.msra.mxu0 0.0
  %948 = vmatprep.subr.mxu0 0.0
  %949 = vmatpush1.msra.mxu0 0.0
  %950 = vmatprep.subr.mxu0 0.0
  %951 = vmatpush1.msra.mxu0 0.0
  %952 = vmatprep.subr.mxu0 0.0
  %953 = vmatpush1.msra.mxu0 0.0
  %954 = vmatprep.subr.mxu0 0.0
  %955 = vmatpush1.msra.mxu0 0.0
  %956 = vmatprep.subr.mxu0 0.0
  %957 = vmatpush1.msra.mxu0 0.0
  %958 = vmatprep.subr.mxu0 0.0
  %959 = vmatpush1.msra.mxu0 0.0
  %960 = vmatprep.subr.mxu0 0.0
  %961 = vmatpush1.msra.mxu0 0.0
  %962 = vmatprep.subr.mxu0 0.0
  %963 = vmatpush1.msra.mxu0 0.0
  %964 = vmatprep.subr.mxu0 0.0
  %965 = vmatpush1.msra.mxu0 0.0
  %966 = vmatprep.subr.mxu0 0.0
  %967 = vmatpush1.msra.mxu0 0.0
  %968 = vmatprep.subr.mxu0 0.0
  %969 = vmatpush1.msra.mxu0 0.0
  %970 = vmatprep.mubr.f32.mxu0 0.0
  %971 = vmatmul.mubr.f32.gmra.mrb[0].mxu0 %v901
  %v972 = vpop.f32.mrb[0].mxu0
  %v973 = vadd.f32 %v898, %v972
  %v974 = vpop.f32.mrb[0].mxu0
  %975 = vmatprep.mubr.f32.mxu0 0.0
  %976 = vmatmul.mubr.f32.gmra.mrb[0].mxu0 %v904
  %v977 = vpop.f32.mrb[0].mxu0
  %v978 = vadd.f32 %v898, %v977
  %v979 = vpop.f32.mrb[0].mxu0
  %980 = vdwg.mxu0
  %v981 = vmax.f32 %v973, 0.0
  %v982 = vmax.f32 %v978, 0.0
  %v983 = vld [vmem:[%s8] sm:$0xff]
  %v984 = vld [vmem:[%s8 + $0x8] sm:$0xff]
  %v985 = vld [vmem:[%s8 + $0x10] sm:$0xff]
  %v986 = vld [vmem:[%s8 + $0x18] sm:$0xff]
  %v987 = vld [vmem:[%s8 + $0x20] sm:$0xff]
  %v988 = vld [vmem:[%s8 + $0x28] sm:$0xff]
  %v989 = vld [vmem:[%s9] sm:$0x1]
  %v991 = vlaneseq
  %v992 = vshrl.u32 %v991, 7
  %v993 = vsub.s32 0, %v992
  %v994 = vrot.slane %v989, %v993
  %v997 = vsel %vm549, %v981, 0
  %v1000 = vsel %vm549, %v982, 0
  %1002 = vmatprep.subr.mxu0 0.0
  %1003 = vmatpush1.msra.mxu0 %v983
  %1004 = vmatprep.subr.mxu0 0.0
  %1005 = vmatpush1.msra.mxu0 %v984
  %1006 = vmatprep.subr.mxu0 0.0
  %1007 = vmatpush1.msra.mxu0 %v985
  %1008 = vmatprep.subr.mxu0 0.0
  %1009 = vmatpush1.msra.mxu0 %v986
  %1010 = vmatprep.subr.mxu0 0.0
  %1011 = vmatpush1.msra.mxu0 %v987
  %1012 = vmatprep.subr.mxu0 0.0
  %1013 = vmatpush1.msra.mxu0 %v988
  %1014 = vmatprep.subr.mxu0 0.0
  %1015 = vmatpush1.msra.mxu0 0.0
  %1016 = vmatprep.subr.mxu0 0.0
  %1017 = vmatpush1.msra.mxu0 0.0
  %1018 = vmatprep.subr.mxu0 0.0
  %1019 = vmatpush1.msra.mxu0 0.0
  %1020 = vmatprep.subr.mxu0 0.0
  %1021 = vmatpush1.msra.mxu0 0.0
  %1022 = vmatprep.subr.mxu0 0.0
  %1023 = vmatpush1.msra.mxu0 0.0
  %1024 = vmatprep.subr.mxu0 0.0
  %1025 = vmatpush1.msra.mxu0 0.0
  %1026 = vmatprep.subr.mxu0 0.0
  %1027 = vmatpush1.msra.mxu0 0.0
  %1028 = vmatprep.subr.mxu0 0.0
  %1029 = vmatpush1.msra.mxu0 0.0
  %1030 = vmatprep.subr.mxu0 0.0
  %1031 = vmatpush1.msra.mxu0 0.0
  %1032 = vmatprep.subr.mxu0 0.0
  %1033 = vmatpush1.msra.mxu0 0.0
  %1034 = vmatprep.subr.mxu0 0.0
  %1035 = vmatpush1.msra.mxu0 0.0
  %1036 = vmatprep.subr.mxu0 0.0
  %1037 = vmatpush1.msra.mxu0 0.0
  %1038 = vmatprep.subr.mxu0 0.0
  %1039 = vmatpush1.msra.mxu0 0.0
  %1040 = vmatprep.subr.mxu0 0.0
  %1041 = vmatpush1.msra.mxu0 0.0
  %1042 = vmatprep.subr.mxu0 0.0
  %1043 = vmatpush1.msra.mxu0 0.0
  %1044 = vmatprep.subr.mxu0 0.0
  %1045 = vmatpush1.msra.mxu0 0.0
  %1046 = vmatprep.subr.mxu0 0.0
  %1047 = vmatpush1.msra.mxu0 0.0
  %1048 = vmatprep.subr.mxu0 0.0
  %1049 = vmatpush1.msra.mxu0 0.0
  %1050 = vmatprep.subr.mxu0 0.0
  %1051 = vmatpush1.msra.mxu0 0.0
  %1052 = vmatprep.subr.mxu0 0.0
  %1053 = vmatpush1.msra.mxu0 0.0
  %1054 = vmatprep.subr.mxu0 0.0
  %1055 = vmatpush1.msra.mxu0 0.0
  %1056 = vmatprep.subr.mxu0 0.0
  %1057 = vmatpush1.msra.mxu0 0.0
  %1058 = vmatprep.subr.mxu0 0.0
  %1059 = vmatpush1.msra.mxu0 0.0
  %1060 = vmatprep.subr.mxu0 0.0
  %1061 = vmatpush1.msra.mxu0 0.0
  %1062 = vmatprep.subr.mxu0 0.0
  %1063 = vmatpush1.msra.mxu0 0.0
  %1064 = vmatprep.subr.mxu0 0.0
  %1065 = vmatpush1.msra.mxu0 0.0
  %1066 = vmatprep.mubr.f32.mxu0 0.0
  %1067 = vmatmul.mubr.f32.gmra.mrb[0].mxu0 %v997
  %v1068 = vpop.f32.mrb[0].mxu0
  %v1069 = vadd.f32 %v994, %v1068
  %v1070 = vpop.f32.mrb[0].mxu0
  %1071 = vmatprep.mubr.f32.mxu0 0.0
  %1072 = vmatmul.mubr.f32.gmra.mrb[0].mxu0 %v1000
  %v1073 = vpop.f32.mrb[0].mxu0
  %v1074 = vadd.f32 %v994, %v1073
  %v1075 = vpop.f32.mrb[0].mxu0
  %1076 = vdwg.mxu0
  %v1077 = vmax.f32 %v1069, 0.0
  %v1078 = vmax.f32 %v1074, 0.0
  %v1079 = vld [vmem:[%s10] sm:$0xff]
  %v1080 = vld [vmem:[%s10 + $0x8] sm:$0xff]
  %v1081 = vld [vmem:[%s10 + $0x10] sm:$0xff]
  %v1082 = vld [vmem:[%s11] sm:$0x1]
  %v1084 = vlaneseq
  %v1085 = vshrl.u32 %v1084, 7
  %v1086 = vsub.s32 0, %v1085
  %v1087 = vrot.slane %v1082, %v1086
  %vm1089 = vcmask 195584
  %v1091 = vsel %vm1089, %v1077, 0
  %v1094 = vsel %vm1089, %v1078, 0
  %1096 = vmatprep.subr.mxu0 0.0
  %1097 = vmatpush1.msra.mxu0 %v1079
  %1098 = vmatprep.subr.mxu0 0.0
  %1099 = vmatpush1.msra.mxu0 %v1080
  %1100 = vmatprep.subr.mxu0 0.0
  %1101 = vmatpush1.msra.mxu0 %v1081
  %1102 = vmatprep.subr.mxu0 0.0
  %1103 = vmatpush1.msra.mxu0 0.0
  %1104 = vmatprep.subr.mxu0 0.0
  %1105 = vmatpush1.msra.mxu0 0.0
  %1106 = vmatprep.subr.mxu0 0.0
  %1107 = vmatpush1.msra.mxu0 0.0
  %1108 = vmatprep.subr.mxu0 0.0
  %1109 = vmatpush1.msra.mxu0 0.0
  %1110 = vmatprep.subr.mxu0 0.0
  %1111 = vmatpush1.msra.mxu0 0.0
  %1112 = vmatprep.subr.mxu0 0.0
  %1113 = vmatpush1.msra.mxu0 0.0
  %1114 = vmatprep.subr.mxu0 0.0
  %1115 = vmatpush1.msra.mxu0 0.0
  %1116 = vmatprep.subr.mxu0 0.0
  %1117 = vmatpush1.msra.mxu0 0.0
  %1118 = vmatprep.subr.mxu0 0.0
  %1119 = vmatpush1.msra.mxu0 0.0
  %1120 = vmatprep.subr.mxu0 0.0
  %1121 = vmatpush1.msra.mxu0 0.0
  %1122 = vmatprep.subr.mxu0 0.0
  %1123 = vmatpush1.msra.mxu0 0.0
  %1124 = vmatprep.subr.mxu0 0.0
  %1125 = vmatpush1.msra.mxu0 0.0
  %1126 = vmatprep.subr.mxu0 0.0
  %1127 = vmatpush1.msra.mxu0 0.0
  %1128 = vmatprep.subr.mxu0 0.0
  %1129 = vmatpush1.msra.mxu0 0.0
  %1130 = vmatprep.subr.mxu0 0.0
  %1131 = vmatpush1.msra.mxu0 0.0
  %1132 = vmatprep.subr.mxu0 0.0
  %1133 = vmatpush1.msra.mxu0 0.0
  %1134 = vmatprep.subr.mxu0 0.0
  %1135 = vmatpush1.msra.mxu0 0.0
  %1136 = vmatprep.subr.mxu0 0.0
  %1137 = vmatpush1.msra.mxu0 0.0
  %1138 = vmatprep.subr.mxu0 0.0
  %1139 = vmatpush1.msra.mxu0 0.0
  %1140 = vmatprep.subr.mxu0 0.0
  %1141 = vmatpush1.msra.mxu0 0.0
  %1142 = vmatprep.subr.mxu0 0.0
  %1143 = vmatpush1.msra.mxu0 0.0
  %1144 = vmatprep.subr.mxu0 0.0
  %1145 = vmatpush1.msra.mxu0 0.0
  %1146 = vmatprep.subr.mxu0 0.0
  %1147 = vmatpush1.msra.mxu0 0.0
  %1148 = vmatprep.subr.mxu0 0.0
  %1149 = vmatpush1.msra.mxu0 0.0
  %1150 = vmatprep.subr.mxu0 0.0
  %1151 = vmatpush1.msra.mxu0 0.0
  %1152 = vmatprep.subr.mxu0 0.0
  %1153 = vmatpush1.msra.mxu0 0.0
  %1154 = vmatprep.subr.mxu0 0.0
  %1155 = vmatpush1.msra.mxu0 0.0
  %1156 = vmatprep.subr.mxu0 0.0
  %1157 = vmatpush1.msra.mxu0 0.0
  %1158 = vmatprep.subr.mxu0 0.0
  %1159 = vmatpush1.msra.mxu0 0.0
  %1160 = vmatprep.mubr.f32.mxu0 0.0
  %1161 = vmatmul.mubr.f32.gmra.mrb[0].mxu0 %v1091
  %v1162 = vpop.f32.mrb[0].mxu0
  %v1163 = vadd.f32 %v1087, %v1162
  %v1164 = vpop.f32.mrb[0].mxu0
  %1165 = vmatprep.mubr.f32.mxu0 0.0
  %1166 = vmatmul.mubr.f32.gmra.mrb[0].mxu0 %v1094
  %v1167 = vpop.f32.mrb[0].mxu0
  %v1168 = vadd.f32 %v1087, %v1167
  %v1169 = vpop.f32.mrb[0].mxu0
  %1170 = vdwg.mxu0
  %vm1171 = vcmask 31744
  %1172 = vst.msk [vmem:[%s12] sm:$0xff] %vm1171, %v1163
  %1173 = vst.msk [vmem:[%s12 + $0x8] sm:$0xff] %vm1171, %v1168
  // Predicated region
  $region50: #{tpu_custom_call.1} parent=0 // pred_check
    _
  $region51: #{tpu_custom_call.1} parent=0 // pred_check_branch
    %1175 = sbr.rel (0) target = $region53
  $region52: #{tpu_custom_call.1} parent=0 // pred_region
    _
  $region53: #{tpu_custom_call.1} parent=0 // pred_fallthru
    _
  // Predicated region
  $region54: #{tpu_custom_call.1} parent=0 // pred_check
    _
  $region55: #{tpu_custom_call.1} parent=0 // pred_check_branch
    %1177 = sbr.rel (0) target = $region57
  $region56: #{tpu_custom_call.1} parent=0 // pred_region
    _
  $region57: #{tpu_custom_call.1} parent=0 // pred_fallthru
    _

</llo_original>
